<compile_context>
chip_gen: v7x
topology: tpu7x:2x2x1
jax: 0.10.0
libtpu: 0.0.40
codegen_flags: <defaults>
</compile_context>

<pallas_src>
import jax
import jax.numpy as jnp
from jax.experimental import pallas as pl
from jax.experimental.pallas import tpu as pltpu


# ----------------------------------------------------------------------------
# Fast path: true no-op (highest-value recommendation — no pallas_call at all).
# ----------------------------------------------------------------------------
def dqn_forward(x):
    """DQN.forward is the identity; returning x emits zero HBM traffic."""
    return x


# ----------------------------------------------------------------------------
# Materialized copy path (only if a fresh output buffer is genuinely required).
# ----------------------------------------------------------------------------
def _copy_kernel(x_ref, o_ref):
    # Straight pass-through of the current VMEM tile.
    o_ref[...] = x_ref[...]


def _sublane_multiple(dtype) -> int:
    # f32 -> 8 rows/vreg, bf16 -> 16, int8/fp8 -> 32 (sub-32-bit packing).
    itemsize = jnp.dtype(dtype).itemsize
    return max(8, 32 // max(1, itemsize))


def _choose_layout(total: int, batch: int, feat: int):
    """Pick a lane-dense (rows, cols) view: cols a large multiple of 128."""
    if total % 128 == 0:
        k = total // 128
        best = 1
        # Largest divisor of k up to 256 => cols is a multiple of 128, <= 32768.
        for d in range(1, min(k, 256) + 1):
            if k % d == 0:
                best = d
        cols = 128 * best
        return total // cols, cols
    # Ragged fallback: [batch, prod(rest)] — full-dim last block is legal even
    # when cols % 128 != 0 (masked stores; perf-only concern). No padding.
    return batch, feat


def dqn_forward_materialized(x, *, alias_input: bool = False,
                             tile_budget_bytes: int = 6 * 1024 * 1024):
    """Tiled VMEM copy implementing the identity with a fresh (or aliased)
    output buffer. Set alias_input=True (and donate the input under jit) to
    avoid allocating a new HBM buffer entirely."""
    orig_shape = x.shape
    total = x.size
    batch = orig_shape[0] if x.ndim >= 2 else 1
    feat = total // max(1, batch)

    rows, cols = _choose_layout(total, batch, feat)
    flat = x.reshape(rows, cols)

    itemsize = jnp.dtype(x.dtype).itemsize
    sub = _sublane_multiple(x.dtype)
    row_bytes = max(1, cols * itemsize)

    # Largest sublane-aligned tile under the per-buffer VMEM budget.
    # 2 arrays (in + out) x 2 pipeline buffers x 6 MiB = 24 MiB < 32 MiB scoped
    # VMEM on every generation (incl. v7x with 64 MiB physical VMEM).
    max_rows_by_budget = max(1, tile_budget_bytes // row_bytes)
    if rows >= 2 * sub:
        # Keep >= 2 grid steps so both v7x TensorCores issue DMAs.
        tile_rows = min(max_rows_by_budget, (rows + 1) // 2)
        tile_rows = max(sub, (tile_rows // sub) * sub)
        tile_rows = min(tile_rows, rows)
    else:
        tile_rows = rows  # full-dim block (legal regardless of sublane count)

    out = pl.pallas_call(
        _copy_kernel,
        out_shape=jax.ShapeDtypeStruct((rows, cols), x.dtype),
        grid_spec=pltpu.PrefetchScalarGridSpec(
            num_scalar_prefetch=0,
            grid=(pl.cdiv(rows, tile_rows),),
            in_specs=[pl.BlockSpec((tile_rows, cols), lambda i: (i, 0))],
            out_specs=pl.BlockSpec((tile_rows, cols), lambda i: (i, 0)),
        ),
        compiler_params=pltpu.CompilerParams(
            dimension_semantics=("parallel",),
            vmem_limit_bytes=32 * 1024 * 1024,
        ),
        input_output_aliases=({0: 0} if alias_input else {}),
    )(flat)
    return out.reshape(orig_shape)


if __name__ == "__main__":
    key = jax.random.PRNGKey(0)
    # Small NCHW-like input consistent with a DQN-style module.
    x = jax.random.normal(key, (2, 4, 16, 16), dtype=jnp.float32)

    # 1) Recommended identity path: zero-cost, no kernel launch.
    y0 = jax.block_until_ready(dqn_forward(x))
    assert y0.shape == x.shape and y0.dtype == x.dtype
    assert bool(jnp.allclose(y0, x)), "identity fast-path mismatch"

    # 2) Materialized Pallas copy (lane-dense layout, tuned tiles).
    y1 = jax.block_until_ready(dqn_forward_materialized(x))
    assert y1.shape == x.shape and y1.dtype == x.dtype
    assert bool(jnp.allclose(y1, x)), "pallas copy kernel mismatch"

    # 3) Aliased-output variant (input_output_aliases={0: 0}); wrap in
    #    jax.jit(..., donate_argnums=0) in production to drop the extra buffer.
    y2 = jax.block_until_ready(dqn_forward_materialized(x, alias_input=True))
    assert y2.shape == x.shape and y2.dtype == x.dtype
    assert bool(jnp.allclose(y2, x)), "aliased pallas kernel mismatch"

    print("KERNEL_OK")
</pallas_src>

<mosaic_0001>
module attributes {stable_mosaic.version = 11 : i64} {
  func.func @_copy_kernel(%arg0: i32, %arg1: memref<1x2048xf32, #tpu.memory_space<vmem>>, %arg2: memref<1x2048xf32, #tpu.memory_space<vmem>>) attributes {dimension_semantics = [#tpu.dimension_semantics<parallel>], iteration_bounds = array<i64: 1>, scalar_prefetch = 0 : i64, scratch_operands = 0 : i64, tpu.core_type = #tpu.core_type<tc>, window_params = [{transform_indices = @transform_0, window_bounds = array<i64: 1, 2048>}, {transform_indices = @transform_1, window_bounds = array<i64: 1, 2048>}]} {
    %c0 = arith.constant 0 : index
    %c0_0 = arith.constant 0 : index
    %0 = vector.load %arg1[%c0, %c0_0] : memref<1x2048xf32, #tpu.memory_space<vmem>>, vector<1x2048xf32>
    %c0_1 = arith.constant 0 : index
    %c0_2 = arith.constant 0 : index
    %1 = vector.load %arg2[%c0_1, %c0_2] : memref<1x2048xf32, #tpu.memory_space<vmem>>, vector<1x2048xf32>
    tpu.vector_store %arg2[%c0_1, %c0_2], %0 {strides = array<i32>} : memref<1x2048xf32, #tpu.memory_space<vmem>>, vector<1x2048xf32>,
    return
  }
  func.func @transform_0(%arg0: i32) -> (i32, i32) {
    %c0_i32 = arith.constant 0 : i32
    %c0_i32_0 = arith.constant 0 : i32
    return %arg0, %c0_i32 : i32, i32
  }
  func.func @transform_1(%arg0: i32) -> (i32, i32) {
    %c0_i32 = arith.constant 0 : i32
    %c0_i32_0 = arith.constant 0 : i32
    return %arg0, %c0_i32 : i32, i32
  }
}

</mosaic_0001>

<llo_original>
// kernel: tpu_custom_call.1
$region0: #{tpu_custom_call.1}
  #allocation0 [shape = 'u32[]', space=smem, size = 0x4, offset = 0x4, fixed_abs, tag = 'smem constant byte address 0x4 - core index']
  #allocation1 [shape = 'u32[144,128]{1,0:T(1,128)}', space=vmem, size = 0x12000, scoped, tag = 'internal scratch']
  %s0 = inlined_call_operand.hbm [shape: f32[1,2048], index: 0, kind: input, shape index: {}]
  %s1 = inlined_call_operand.hbm [shape: f32[1,2048], index: 1, kind: output, shape index: {}]
  %s2 = sld [smem:[#allocation0]]
  $region18: #{tpu_custom_call.1} parent=0
    _
  %s4 = ssub.s32 1, %s2
  %s5 = scalar_select 0, %s4, %s2
  $region1: #{tpu_custom_call.1} parent=0
    #allocation2 [shape = 'u8[8192]{0}', space=vmem, size = 0x2000, scoped, tag = 'input window, operand 0, single buffered']
    #allocation3 [shape = 's32[1]{0}', space=sflag, size = 0x4, scoped, tag = 'scoped memory for tpu_custom_call.1']
    #allocation4 [shape = 's32[1]{0}', space=sflag, size = 0x4, scoped, tag = 'scoped memory for tpu_custom_call.1']
    #allocation5 [shape = 'u8[8192]{0}', space=vmem, size = 0x2000, scoped, tag = 'output window, operand 0, single buffered']
    %6 = vsyncpa [#allocation3], 0
    %7 = vsyncpa [#allocation4], 0
    // Predicated region
    $region2: #{tpu_custom_call.1} parent=1 // pred_check
      _
    $region3: #{tpu_custom_call.1} parent=1 // pred_check_branch
      %9 = sbr.rel (0) target = $region5
    $region4: #{tpu_custom_call.1} parent=1 // pred_region
      %s11 = ssub.s32 256, 256
      %12 = vsyncadd [#allocation3], %s11
      %s14 = sshll.u32 [#allocation2], 4
      %s15 = int_to_ptr.vmem [resolvable:$true] %s14
      %17 = dma.hbm_to_vmem [thread:$0]  %s0, 256, %s15, [#allocation3]
    $region5: #{tpu_custom_call.1} parent=1 // pred_fallthru
      _
    // Predicated region
    $region6: #{tpu_custom_call.1} parent=1 // pred_check
      _
    $region7: #{tpu_custom_call.1} parent=1 // pred_check_branch
      %19 = sbr.rel (0) target = $region9
    $region8: #{tpu_custom_call.1} parent=1 // pred_region
      %20 = dma.done [#allocation3], 256
    $region9: #{tpu_custom_call.1} parent=1 // pred_fallthru
      _
    %v21 = vld [vmem:[#allocation2] sm:$0xff]
    %v22 = vld [vmem:[#allocation2 + $0x8] sm:$0xff]
    %23 = vst [vmem:[#allocation5] sm:$0xff] %v21
    %24 = vst [vmem:[#allocation5 + $0x8] sm:$0xff] %v22
    // Predicated region
    $region10: #{tpu_custom_call.1} parent=1 // pred_check
      _
    $region11: #{tpu_custom_call.1} parent=1 // pred_check_branch
      %26 = sbr.rel (0) target = $region13
    $region12: #{tpu_custom_call.1} parent=1 // pred_region
      %s28 = ssub.s32 256, 256
      %29 = vsyncadd [#allocation4], %s28
      %s31 = sshll.u32 [#allocation5], 4
      %s32 = int_to_ptr.vmem [resolvable:$true] %s31
      %34 = dma.vmem_to_hbm [thread:$0]  %s32, 256, %s1, [#allocation4]
    $region13: #{tpu_custom_call.1} parent=1 // pred_fallthru
      _
    // Predicated region
    $region14: #{tpu_custom_call.1} parent=1 // pred_check
      _
    $region15: #{tpu_custom_call.1} parent=1 // pred_check_branch
      %36 = sbr.rel (0) target = $region17
    $region16: #{tpu_custom_call.1} parent=1 // pred_region
      %37 = dma.done [#allocation4], 256
    $region17: #{tpu_custom_call.1} parent=1 // pred_fallthru
      _
    %38 = vsyncpa [#allocation3], 1
    %39 = vsyncpa [#allocation4], 1

</llo_original>
